<compile_context>
chip_gen: v6e
topology: v6e:2x2x1
jax: 0.10.0
libtpu: 0.0.40
codegen_flags: <defaults>
</compile_context>

<pallas_src>
import functools

import jax
import jax.numpy as jnp
from jax.experimental import pallas as pl
from jax.experimental.pallas import tpu as pltpu


def _round_up(x, m):
    return ((x + m - 1) // m) * m


def _cdiv(a, b):
    return -(-a // b)


# Rows per grid step.  Big tiles amortize the ~0.35 us per-step overhead; with
# state_dim/hidden/action this small, even TB=1024 uses well under 1 MiB of
# VMEM per buffered block, safe against v7x's 64 MiB VMEM.
_TB_MAX = 1024


def _actor_kernel(state_ref, w1_ref, b1_ref, w2_ref, b2_ref, w3_ref, b3_ref,
                  mu_ref):
    # Hidden layer 1: relu(state @ W1 + b1)  (f32 accumulation on the MXU).
    a = jnp.dot(state_ref[...], w1_ref[...], preferred_element_type=jnp.float32)
    a = jnp.maximum(a + b1_ref[...], 0.0)

    # Hidden layer 2: relu(a @ W2 + b2)
    a = jnp.dot(a.astype(w2_ref.dtype), w2_ref[...],
                preferred_element_type=jnp.float32)
    a = jnp.maximum(a + b2_ref[...], 0.0)

    # Mean head: tanh(a @ W3 + b3)
    mu = jnp.dot(a.astype(w3_ref.dtype), w3_ref[...],
                 preferred_element_type=jnp.float32)
    mu_ref[...] = jnp.tanh(mu + b3_ref[...]).astype(mu_ref.dtype)


def prepare_actor_params(params, matmul_dtype=jnp.bfloat16,
                         log_std_min=-5.0, log_std_max=2.0):
    """One-time padding / casting of the static Actor weights.

    Call once (e.g. after init or after each optimizer step), NOT per forward
    call.  Returns (prepared_arrays, dims) where dims = (S, H, A, S_p, H_p, A_p)
    is static Python metadata.
    """
    S, H = params["w1"].shape
    A = params["w3"].shape[1]
    S_p = _round_up(S, 8)      # sublane-aligned only; no 128-lane padding
    H_p = _round_up(H, 128)
    A_p = _round_up(A, 128)

    def pad2(x, rows, cols):
        return jnp.pad(x, ((0, rows - x.shape[0]), (0, cols - x.shape[1])))

    prepared = dict(
        w1=pad2(params["w1"], S_p, H_p).astype(matmul_dtype),
        b1=pad2(params["b1"].reshape(1, -1), 1, H_p).astype(jnp.float32),
        w2=pad2(params["w2"], H_p, H_p).astype(matmul_dtype),
        b2=pad2(params["b2"].reshape(1, -1), 1, H_p).astype(jnp.float32),
        w3=pad2(params["w3"], H_p, A_p).astype(matmul_dtype),
        b3=pad2(params["b3"].reshape(1, -1), 1, A_p).astype(jnp.float32),
        # sigma is state-independent: compute it once here, outside the kernel.
        sigma=jnp.exp(jnp.clip(params["log_std"].reshape(-1),
                               log_std_min, log_std_max)).astype(jnp.float32),
    )
    dims = (S, H, A, S_p, H_p, A_p)
    return prepared, dims


def _batch_tiling(B):
    """Balanced batch tiles: minimal padding, >=2 tiles once B > _TB_MAX."""
    n_tiles = max(1, _cdiv(B, _TB_MAX))
    tb = _round_up(_cdiv(B, n_tiles), 8)
    return n_tiles, tb


def actor_forward(state, prepared, dims, return_padded=False):
    """Actor forward pass.

    state:    (B, S) float array.
    prepared: dict from prepare_actor_params (padded / cast weights + sigma).
    dims:     static (S, H, A, S_p, H_p, A_p) from prepare_actor_params.
    Returns (mu (B, A), sigma (A,)); with return_padded=True, mu is the raw
    padded (B_pad, A_pad) kernel output (no post-kernel slice copy).
    """
    S, H, A, S_p, H_p, A_p = dims
    B = state.shape[0]
    assert state.shape[1] == S

    n_tiles, TB = _batch_tiling(B)
    B_pad = n_tiles * TB

    mm_dtype = prepared["w1"].dtype
    # Only batch-row padding + sublane padding of the narrow feature dim; the
    # state block is the full (padded) feature width so it stays lane-cheap.
    state_p = jnp.pad(state, ((0, B_pad - B), (0, S_p - S))).astype(mm_dtype)

    # Weights/biases: one block covering the whole (padded) array, index_map
    # pinned to (0,0) -> VMEM-resident across grid steps; single-buffered
    # since the block index never changes.
    def resident(shape):
        return pl.BlockSpec(shape, lambda i: (0, 0),
                            pipeline_mode=pl.Buffered(1))

    mu_p = pl.pallas_call(
        _actor_kernel,
        out_shape=jax.ShapeDtypeStruct((B_pad, A_p), jnp.float32),
        grid=(n_tiles,),
        in_specs=[
            pl.BlockSpec((TB, S_p), lambda i: (i, 0)),   # state, tiled over batch
            resident((S_p, H_p)),                        # w1
            resident((1, H_p)),                          # b1
            resident((H_p, H_p)),                        # w2
            resident((1, H_p)),                          # b2
            resident((H_p, A_p)),                        # w3
            resident((1, A_p)),                          # b3
        ],
        out_specs=pl.BlockSpec((TB, A_p), lambda i: (i, 0)),
        compiler_params=pltpu.CompilerParams(
            dimension_semantics=("parallel",)),
    )(state_p, prepared["w1"], prepared["b1"], prepared["w2"], prepared["b2"],
      prepared["w3"], prepared["b3"])

    sigma = prepared["sigma"]
    if return_padded:
        return mu_p, sigma
    return mu_p[:B, :A], sigma


def init_actor_params(key, state_dim, action_dim, hidden_dim):
    """Deterministic init mimicking nn.Linear default (U[-1/sqrt(fan_in), +])."""
    ks = jax.random.split(key, 6)

    def linear(kw, kb, fan_in, fan_out):
        bound = 1.0 / jnp.sqrt(jnp.float32(fan_in))
        # stored as (in, out) so the kernel computes x @ W directly
        w = jax.random.uniform(kw, (fan_in, fan_out), jnp.float32, -bound, bound)
        b = jax.random.uniform(kb, (1, fan_out), jnp.float32, -bound, bound)
        return w, b

    w1, b1 = linear(ks[0], ks[1], state_dim, hidden_dim)
    w2, b2 = linear(ks[2], ks[3], hidden_dim, hidden_dim)
    w3, b3 = linear(ks[4], ks[5], hidden_dim, action_dim)
    log_std = jnp.zeros((1, action_dim), jnp.float32)  # torch.zeros(action_dim)
    return dict(w1=w1, b1=b1, w2=w2, b2=b2, w3=w3, b3=b3, log_std=log_std)


def actor_forward_ref(state, params, log_std_min=-5.0, log_std_max=2.0):
    """Pure-JAX reference for correctness checking."""
    a = jnp.maximum(state @ params["w1"] + params["b1"], 0.0)
    a = jnp.maximum(a @ params["w2"] + params["b2"], 0.0)
    mu = jnp.tanh(a @ params["w3"] + params["b3"])
    sigma = jnp.exp(jnp.clip(params["log_std"], log_std_min, log_std_max))
    return mu, sigma.reshape(-1)


# TODO(synk): Actor.distribution / log_probs_bc (torch.distributions Normal +
# Independent) are not part of forward() and are left to plain JAX consumers.

if __name__ == "__main__":
    state_dim = 16
    action_dim = 8
    hidden_dim = 32

    key = jax.random.PRNGKey(0)
    k_params, k_s1, k_s2, k_s3 = jax.random.split(key, 4)
    params = init_actor_params(k_params, state_dim, action_dim, hidden_dim)

    # ---- f32 path (exact semantics check) --------------------------------
    prep_f32, dims = prepare_actor_params(params, matmul_dtype=jnp.float32)
    fwd_f32 = jax.jit(functools.partial(actor_forward, dims=dims))

    state_small = jax.random.normal(k_s1, (8, state_dim), jnp.float32)
    mu, sigma = fwd_f32(state_small, prep_f32)
    jax.block_until_ready((mu, sigma))
    mu_ref, sigma_ref = actor_forward_ref(state_small, params)
    assert mu.shape == (8, action_dim)
    assert sigma.shape == (action_dim,)
    assert jnp.allclose(mu, mu_ref, atol=1e-5, rtol=1e-5)
    assert jnp.allclose(sigma, sigma_ref, atol=1e-6, rtol=1e-6)

    # Non-multiple batch: balanced tiling pads 300 -> 304 (not 512).
    state_mid = jax.random.normal(k_s2, (300, state_dim), jnp.float32)
    mu_m, sigma_m = fwd_f32(state_mid, prep_f32)
    jax.block_until_ready((mu_m, sigma_m))
    mu_m_ref, _ = actor_forward_ref(state_mid, params)
    assert mu_m.shape == (300, action_dim)
    assert jnp.allclose(mu_m, mu_m_ref, atol=1e-5, rtol=1e-5)

    # ---- bf16 default path (multi-tile grid, both TCs get work on v7x) ---
    prep_bf16, dims_b = prepare_actor_params(params)  # matmul_dtype=bf16
    fwd_bf16 = jax.jit(functools.partial(actor_forward, dims=dims_b))

    state_big = jax.random.normal(k_s3, (2500, state_dim), jnp.float32)
    mu_b, sigma_b = fwd_bf16(state_big, prep_bf16)
    jax.block_until_ready((mu_b, sigma_b))
    mu_b_ref, sigma_b_ref = actor_forward_ref(state_big, params)
    assert mu_b.shape == (2500, action_dim)
    assert jnp.allclose(mu_b, mu_b_ref, atol=5e-2, rtol=0)   # bf16 tolerance
    assert jnp.allclose(sigma_b, sigma_b_ref, atol=1e-6, rtol=1e-6)

    # Padded-output variant (skips the post-kernel slice copy).
    fwd_pad = jax.jit(functools.partial(actor_forward, dims=dims_b,
                                        return_padded=True))
    mu_p, _ = fwd_pad(state_small, prep_bf16)
    jax.block_until_ready(mu_p)
    assert mu_p.shape[1] == 128 and mu_p.shape[0] % 8 == 0

    print("KERNEL_OK")
</pallas_src>

<mosaic_0001>
module attributes {stable_mosaic.version = 11 : i64} {
  func.func @_actor_kernel(%arg0: i32, %arg1: memref<8x16xf32, #tpu.memory_space<vmem>>, %arg2: memref<16x128xf32, #tpu.memory_space<vmem>>, %arg3: memref<1x128xf32, #tpu.memory_space<vmem>>, %arg4: memref<128x128xf32, #tpu.memory_space<vmem>>, %arg5: memref<1x128xf32, #tpu.memory_space<vmem>>, %arg6: memref<128x128xf32, #tpu.memory_space<vmem>>, %arg7: memref<1x128xf32, #tpu.memory_space<vmem>>, %arg8: memref<8x128xf32, #tpu.memory_space<vmem>>) attributes {dimension_semantics = [#tpu.dimension_semantics<parallel>], iteration_bounds = array<i64: 1>, scalar_prefetch = 0 : i64, scratch_operands = 0 : i64, tpu.core_type = #tpu.core_type<tc>, window_params = [{transform_indices = @transform_0, window_bounds = array<i64: 8, 16>}, {pipeline_mode = #tpu.pipeline_mode<synchronous>, transform_indices = @transform_1, window_bounds = array<i64: 16, 128>}, {pipeline_mode = #tpu.pipeline_mode<synchronous>, transform_indices = @transform_2, window_bounds = array<i64: 1, 128>}, {pipeline_mode = #tpu.pipeline_mode<synchronous>, transform_indices = @transform_3, window_bounds = array<i64: 128, 128>}, {pipeline_mode = #tpu.pipeline_mode<synchronous>, transform_indices = @transform_4, window_bounds = array<i64: 1, 128>}, {pipeline_mode = #tpu.pipeline_mode<synchronous>, transform_indices = @transform_5, window_bounds = array<i64: 128, 128>}, {pipeline_mode = #tpu.pipeline_mode<synchronous>, transform_indices = @transform_6, window_bounds = array<i64: 1, 128>}, {transform_indices = @transform_7, window_bounds = array<i64: 8, 128>}]} {
    %c0 = arith.constant 0 : index
    %c0_0 = arith.constant 0 : index
    %0 = vector.load %arg1[%c0, %c0_0] : memref<8x16xf32, #tpu.memory_space<vmem>>, vector<8x16xf32>
    %c0_1 = arith.constant 0 : index
    %c0_2 = arith.constant 0 : index
    %1 = vector.load %arg2[%c0_1, %c0_2] : memref<16x128xf32, #tpu.memory_space<vmem>>, vector<16x128xf32>
    %cst = arith.constant dense<0.000000e+00> : vector<8x128xf32>
    %2 = tpu.matmul %0, %1, %cst {dimension_numbers = #tpu.dot_dimension_numbers<[1], [0], [0], [1], [0, 0, 1, 1], [], []>} : vector<8x16xf32>, vector<16x128xf32>, vector<8x128xf32> -> vector<8x128xf32>
    %c0_3 = arith.constant 0 : index
    %c0_4 = arith.constant 0 : index
    %3 = vector.load %arg3[%c0_3, %c0_4] : memref<1x128xf32, #tpu.memory_space<vmem>>, vector<1x128xf32>
    %4 = vector.broadcast %3 : vector<1x128xf32> to vector<8x128xf32>
    %5 = arith.addf %2, %4 : vector<8x128xf32>
    %cst_5 = arith.constant 0.000000e+00 : f32
    %6 = vector.broadcast %cst_5 : f32 to vector<8x128xf32>
    %7 = arith.maximumf %5, %6 : vector<8x128xf32>
    %c0_6 = arith.constant 0 : index
    %c0_7 = arith.constant 0 : index
    %8 = vector.load %arg4[%c0_6, %c0_7] : memref<128x128xf32, #tpu.memory_space<vmem>>, vector<128x128xf32>
    %cst_8 = arith.constant dense<0.000000e+00> : vector<8x128xf32>
    %9 = tpu.matmul %7, %8, %cst_8 {dimension_numbers = #tpu.dot_dimension_numbers<[1], [0], [0], [1], [0, 0, 1, 1], [], []>} : vector<8x128xf32>, vector<128x128xf32>, vector<8x128xf32> -> vector<8x128xf32>
    %c0_9 = arith.constant 0 : index
    %c0_10 = arith.constant 0 : index
    %10 = vector.load %arg5[%c0_9, %c0_10] : memref<1x128xf32, #tpu.memory_space<vmem>>, vector<1x128xf32>
    %11 = vector.broadcast %10 : vector<1x128xf32> to vector<8x128xf32>
    %12 = arith.addf %9, %11 : vector<8x128xf32>
    %cst_11 = arith.constant 0.000000e+00 : f32
    %13 = vector.broadcast %cst_11 : f32 to vector<8x128xf32>
    %14 = arith.maximumf %12, %13 : vector<8x128xf32>
    %c0_12 = arith.constant 0 : index
    %c0_13 = arith.constant 0 : index
    %15 = vector.load %arg6[%c0_12, %c0_13] : memref<128x128xf32, #tpu.memory_space<vmem>>, vector<128x128xf32>
    %cst_14 = arith.constant dense<0.000000e+00> : vector<8x128xf32>
    %16 = tpu.matmul %14, %15, %cst_14 {dimension_numbers = #tpu.dot_dimension_numbers<[1], [0], [0], [1], [0, 0, 1, 1], [], []>} : vector<8x128xf32>, vector<128x128xf32>, vector<8x128xf32> -> vector<8x128xf32>
    %c0_15 = arith.constant 0 : index
    %c0_16 = arith.constant 0 : index
    %17 = vector.load %arg7[%c0_15, %c0_16] : memref<1x128xf32, #tpu.memory_space<vmem>>, vector<1x128xf32>
    %18 = vector.broadcast %17 : vector<1x128xf32> to vector<8x128xf32>
    %19 = arith.addf %16, %18 : vector<8x128xf32>
    %20 = math.tanh %19 : vector<8x128xf32>
    %c0_17 = arith.constant 0 : index
    %c0_18 = arith.constant 0 : index
    %21 = vector.load %arg8[%c0_17, %c0_18] : memref<8x128xf32, #tpu.memory_space<vmem>>, vector<8x128xf32>
    tpu.vector_store %arg8[%c0_17, %c0_18], %20 {strides = array<i32>} : memref<8x128xf32, #tpu.memory_space<vmem>>, vector<8x128xf32>,
    return
  }
  func.func @transform_0(%arg0: i32) -> (i32, i32) {
    %c0_i32 = arith.constant 0 : i32
    %c0_i32_0 = arith.constant 0 : i32
    return %arg0, %c0_i32 : i32, i32
  }
  func.func @transform_1(%arg0: i32) -> (i32, i32) {
    %c0_i32 = arith.constant 0 : i32
    %c0_i32_0 = arith.constant 0 : i32
    %c0_i32_1 = arith.constant 0 : i32
    return %c0_i32, %c0_i32_0 : i32, i32
  }
  func.func @transform_2(%arg0: i32) -> (i32, i32) {
    %c0_i32 = arith.constant 0 : i32
    %c0_i32_0 = arith.constant 0 : i32
    %c0_i32_1 = arith.constant 0 : i32
    return %c0_i32, %c0_i32_0 : i32, i32
  }
  func.func @transform_3(%arg0: i32) -> (i32, i32) {
    %c0_i32 = arith.constant 0 : i32
    %c0_i32_0 = arith.constant 0 : i32
    %c0_i32_1 = arith.constant 0 : i32
    return %c0_i32, %c0_i32_0 : i32, i32
  }
  func.func @transform_4(%arg0: i32) -> (i32, i32) {
    %c0_i32 = arith.constant 0 : i32
    %c0_i32_0 = arith.constant 0 : i32
    %c0_i32_1 = arith.constant 0 : i32
    return %c0_i32, %c0_i32_0 : i32, i32
  }
  func.func @transform_5(%arg0: i32) -> (i32, i32) {
    %c0_i32 = arith.constant 0 : i32
    %c0_i32_0 = arith.constant 0 : i32
    %c0_i32_1 = arith.constant 0 : i32
    return %c0_i32, %c0_i32_0 : i32, i32
  }
  func.func @transform_6(%arg0: i32) -> (i32, i32) {
    %c0_i32 = arith.constant 0 : i32
    %c0_i32_0 = arith.constant 0 : i32
    %c0_i32_1 = arith.constant 0 : i32
    return %c0_i32, %c0_i32_0 : i32, i32
  }
  func.func @transform_7(%arg0: i32) -> (i32, i32) {
    %c0_i32 = arith.constant 0 : i32
    %c0_i32_0 = arith.constant 0 : i32
    return %arg0, %c0_i32 : i32, i32
  }
}

</mosaic_0001>

<llo_original>
// kernel: actor_forward.1
$region0: #{actor_forward.1}
  #allocation0 [shape = 'u32[]', space=smem, size = 0x4, offset = 0x4, fixed_abs, tag = 'smem constant byte address 0x4 - core index']
  #allocation1 [shape = 'u32[144,128]{1,0:T(1,128)}', space=vmem, size = 0x12000, scoped, tag = 'internal scratch']
  %s0 = inlined_call_operand.hbm [shape: f32[8,16], index: 0, kind: input, shape index: {}]
  %s1 = inlined_call_operand.hbm [shape: f32[16,128], index: 1, kind: input, shape index: {}]
  %s2 = inlined_call_operand.vmem [shape: f32[1,128], index: 2, kind: input, shape index: {}]
  %s3 = inlined_call_operand.hbm [shape: f32[128,128], index: 3, kind: input, shape index: {}]
  %s4 = inlined_call_operand.vmem [shape: f32[1,128], index: 4, kind: input, shape index: {}]
  %s5 = inlined_call_operand.hbm [shape: f32[128,128], index: 5, kind: input, shape index: {}]
  %s6 = inlined_call_operand.vmem [shape: f32[1,128], index: 6, kind: input, shape index: {}]
  %s7 = inlined_call_operand.hbm [shape: f32[8,128], index: 7, kind: output, shape index: {}]
  %s8 = sld [smem:[#allocation0]]
  $region54: #{actor_forward.1} parent=0
    _
  %s10 = ssub.s32 1, %s8
  %s11 = scalar_select 0, %s10, %s8
  $region1: #{actor_forward.1} parent=0
    #allocation2 [shape = 'u8[4096]{0}', space=vmem, size = 0x1000, scoped, tag = 'input window, operand 0, single buffered']
    #allocation3 [shape = 's32[1]{0}', space=sflag, size = 0x4, scoped, tag = 'scoped memory for actor_forward.1']
    #allocation4 [shape = 's32[1]{0}', space=sflag, size = 0x4, scoped, tag = 'scoped memory for actor_forward.1']
    #allocation5 [shape = 'u8[8192]{0}', space=vmem, size = 0x2000, scoped, tag = 'input window, operand 1, single buffered']
    #allocation6 [shape = 's32[1]{0}', space=sflag, size = 0x4, scoped, tag = 'scoped memory for actor_forward.1']
    #allocation7 [shape = 'u8[65536]{0}', space=vmem, size = 0x10000, scoped, tag = 'input window, operand 3, single buffered']
    #allocation8 [shape = 'u8[65536]{0}', space=vmem, size = 0x10000, scoped, tag = 'input window, operand 5, single buffered']
    #allocation9 [shape = 's32[1]{0}', space=sflag, size = 0x4, scoped, tag = 'scoped memory for actor_forward.1']
    #allocation10 [shape = 'u8[4096]{0}', space=vmem, size = 0x1000, scoped, tag = 'output window, operand 0, single buffered']
    %12 = vsyncpa [#allocation3], 0
    %13 = vsyncpa [#allocation6], 0
    %14 = vsyncpa [#allocation9], 0
    %15 = vsyncpa [#allocation4], 0
    // Predicated region
    $region2: #{actor_forward.1} parent=1 // pred_check
      _
    $region3: #{actor_forward.1} parent=1 // pred_check_branch
      %17 = sbr.rel (0) target = $region5
    $region4: #{actor_forward.1} parent=1 // pred_region
      %s19 = ssub.s32 128, 128
      %20 = vsyncadd [#allocation3], %s19
      %s22 = sshll.u32 [#allocation2], 4
      %s23 = int_to_ptr.vmem [resolvable:$true] %s22
      %25 = dma.hbm_to_vmem [thread:$0]  %s0, 128, %s23, [#allocation3]
    $region5: #{actor_forward.1} parent=1 // pred_fallthru
      _
    // Predicated region
    $region6: #{actor_forward.1} parent=1 // pred_check
      _
    $region7: #{actor_forward.1} parent=1 // pred_check_branch
      %27 = sbr.rel (0) target = $region9
    $region8: #{actor_forward.1} parent=1 // pred_region
      %s29 = ssub.s32 256, 256
      %30 = vsyncadd [#allocation6], %s29
      %s31 = sshll.u32 [#allocation5], 4
      %s32 = int_to_ptr.vmem [resolvable:$true] %s31
      %37 = dma.hbm_to_vmem [thread:$0]  %s1, 256, %s32, [#allocation6], 128, 128, 8
    $region9: #{actor_forward.1} parent=1 // pred_fallthru
      _
    // Predicated region
    $region10: #{actor_forward.1} parent=1 // pred_check
      _
    $region11: #{actor_forward.1} parent=1 // pred_check_branch
      %39 = sbr.rel (0) target = $region13
    $region12: #{actor_forward.1} parent=1 // pred_region
      _
    $region13: #{actor_forward.1} parent=1 // pred_fallthru
      _
    // Predicated region
    $region14: #{actor_forward.1} parent=1 // pred_check
      _
    $region15: #{actor_forward.1} parent=1 // pred_check_branch
      %41 = sbr.rel (0) target = $region17
    $region16: #{actor_forward.1} parent=1 // pred_region
      %s43 = ssub.s32 2048, 2048
      %44 = vsyncadd [#allocation6], %s43
      %s45 = sshll.u32 [#allocation7], 4
      %s46 = int_to_ptr.vmem [resolvable:$true] %s45
      %51 = dma.hbm_to_vmem [thread:$0]  %s3, 2048, %s46, [#allocation6], 128, 128, 8
    $region17: #{actor_forward.1} parent=1 // pred_fallthru
      _
    // Predicated region
    $region18: #{actor_forward.1} parent=1 // pred_check
      _
    $region19: #{actor_forward.1} parent=1 // pred_check_branch
      %53 = sbr.rel (0) target = $region21
    $region20: #{actor_forward.1} parent=1 // pred_region
      _
    $region21: #{actor_forward.1} parent=1 // pred_fallthru
      _
    // Predicated region
    $region22: #{actor_forward.1} parent=1 // pred_check
      _
    $region23: #{actor_forward.1} parent=1 // pred_check_branch
      %55 = sbr.rel (0) target = $region25
    $region24: #{actor_forward.1} parent=1 // pred_region
      %s57 = ssub.s32 2048, 2048
      %58 = vsyncadd [#allocation9], %s57
      %s59 = sshll.u32 [#allocation8], 4
      %s60 = int_to_ptr.vmem [resolvable:$true] %s59
      %65 = dma.hbm_to_vmem [thread:$0]  %s5, 2048, %s60, [#allocation9], 128, 128, 8
    $region25: #{actor_forward.1} parent=1 // pred_fallthru
      _
    // Predicated region
    $region26: #{actor_forward.1} parent=1 // pred_check
      _
    $region27: #{actor_forward.1} parent=1 // pred_check_branch
      %67 = sbr.rel (0) target = $region29
    $region28: #{actor_forward.1} parent=1 // pred_region
      _
    $region29: #{actor_forward.1} parent=1 // pred_fallthru
      _
    // Predicated region
    $region30: #{actor_forward.1} parent=1 // pred_check
      _
    $region31: #{actor_forward.1} parent=1 // pred_check_branch
      %69 = sbr.rel (0) target = $region33
    $region32: #{actor_forward.1} parent=1 // pred_region
      %70 = dma.done [#allocation3], 128
    $region33: #{actor_forward.1} parent=1 // pred_fallthru
      _
    // Predicated region
    $region34: #{actor_forward.1} parent=1 // pred_check
      _
    $region35: #{actor_forward.1} parent=1 // pred_check_branch
      %72 = sbr.rel (0) target = $region37
    $region36: #{actor_forward.1} parent=1 // pred_region
      %73 = dma.done [#allocation6], 256
    $region37: #{actor_forward.1} parent=1 // pred_fallthru
      _
    // Predicated region
    $region38: #{actor_forward.1} parent=1 // pred_check
      _
    $region39: #{actor_forward.1} parent=1 // pred_check_branch
      %75 = sbr.rel (0) target = $region41
    $region40: #{actor_forward.1} parent=1 // pred_region
      %76 = dma.done [#allocation6], 2048
    $region41: #{actor_forward.1} parent=1 // pred_fallthru
      _
    // Predicated region
    $region42: #{actor_forward.1} parent=1 // pred_check
      _
    $region43: #{actor_forward.1} parent=1 // pred_check_branch
      %78 = sbr.rel (0) target = $region45
    $region44: #{actor_forward.1} parent=1 // pred_region
      %79 = dma.done [#allocation9], 2048
    $region45: #{actor_forward.1} parent=1 // pred_fallthru
      _
    %v80 = vld [vmem:[#allocation2] sm:$0xff]
    %v81 = vld [vmem:[#allocation5] sm:$0xff]
    %v82 = vld [vmem:[#allocation5 + $0x8] sm:$0xff]
    %v83 = vld [vmem:[%s2] sm:$0x1]
    %v85 = vlaneseq
    %v86 = vshrl.u32 %v85, 7
    %v87 = vsub.s32 0, %v86
    %v88 = vrot.slane %v83, %v87
    %vm90 = vcmask 130048
    %v92 = vsel %vm90, %v80, 0
    %94 = vmatprep.subr.mxu0 0.0
    %95 = vmatpush1.msra.mxu0 0.0
    %96 = vmatprep.subr.mxu0 0.0
    %97 = vmatpush1.msra.mxu0 0.0
    %98 = vmatprep.subr.mxu0 0.0
    %99 = vmatpush1.msra.mxu0 0.0
    %100 = vmatprep.subr.mxu0 0.0
    %101 = vmatpush1.msra.mxu0 0.0
    %102 = vmatprep.subr.mxu0 0.0
    %103 = vmatpush1.msra.mxu0 0.0
    %104 = vmatprep.subr.mxu0 0.0
    %105 = vmatpush1.msra.mxu0 0.0
    %106 = vmatprep.subr.mxu0 0.0
    %107 = vmatpush1.msra.mxu0 0.0
    %108 = vmatprep.subr.mxu0 0.0
    %109 = vmatpush1.msra.mxu0 0.0
    %110 = vmatprep.subr.mxu0 0.0
    %111 = vmatpush1.msra.mxu0 0.0
    %112 = vmatprep.subr.mxu0 0.0
    %113 = vmatpush1.msra.mxu0 0.0
    %114 = vmatprep.subr.mxu0 0.0
    %115 = vmatpush1.msra.mxu0 0.0
    %116 = vmatprep.subr.mxu0 0.0
    %117 = vmatpush1.msra.mxu0 0.0
    %118 = vmatprep.subr.mxu0 0.0
    %119 = vmatpush1.msra.mxu0 0.0
    %120 = vmatprep.subr.mxu0 0.0
    %121 = vmatpush1.msra.mxu0 0.0
    %122 = vmatprep.subr.mxu0 0.0
    %123 = vmatpush1.msra.mxu0 %v82
    %124 = vmatprep.subr.mxu0 0.0
    %125 = vmatpush1.msra.mxu0 %v81
    %126 = vmatprep.subr.mxu0 0.0
    %127 = vmatpush2.msra.mxu0 0.0
    %128 = vmatprep.subr.mxu0 0.0
    %129 = vmatpush2.msra.mxu0 0.0
    %130 = vmatprep.subr.mxu0 0.0
    %131 = vmatpush2.msra.mxu0 0.0
    %132 = vmatprep.subr.mxu0 0.0
    %133 = vmatpush2.msra.mxu0 0.0
    %134 = vmatprep.subr.mxu0 0.0
    %135 = vmatpush2.msra.mxu0 0.0
    %136 = vmatprep.subr.mxu0 0.0
    %137 = vmatpush2.msra.mxu0 0.0
    %138 = vmatprep.subr.mxu0 0.0
    %139 = vmatpush2.msra.mxu0 0.0
    %140 = vmatprep.subr.mxu0 0.0
    %141 = vmatpush2.msra.mxu0 0.0
    %142 = vmatprep.subr.mxu0 0.0
    %143 = vmatpush2.msra.mxu0 0.0
    %144 = vmatprep.subr.mxu0 0.0
    %145 = vmatpush2.msra.mxu0 0.0
    %146 = vmatprep.subr.mxu0 0.0
    %147 = vmatpush2.msra.mxu0 0.0
    %148 = vmatprep.subr.mxu0 0.0
    %149 = vmatpush2.msra.mxu0 0.0
    %150 = vmatprep.subr.mxu0 0.0
    %151 = vmatpush2.msra.mxu0 0.0
    %152 = vmatprep.subr.mxu0 0.0
    %153 = vmatpush2.msra.mxu0 0.0
    %154 = vmatprep.subr.mxu0 0.0
    %155 = vmatpush2.msra.mxu0 0.0
    %156 = vmatprep.subr.mxu0 0.0
    %157 = vmatpush2.msra.mxu0 0.0
    %158 = vmatprep.mubr.f32.mxu0 0.0
    %159 = vmatmul.mubr.f32.gmra.mxu0 %v92
    %v160 = vpop.f32.mrf.mxu0
    %v161 = vadd.f32 %v88, %v160
    %v162 = vpop.f32.mrf.mxu0
    %163 = vdwg.mxu0
    %v164 = vmax.f32 %v161, 0.0
    %v165 = vld [vmem:[#allocation7] sm:$0xff]
    %v166 = vld [vmem:[#allocation7 + $0x8] sm:$0xff]
    %v167 = vld [vmem:[#allocation7 + $0x10] sm:$0xff]
    %v168 = vld [vmem:[#allocation7 + $0x18] sm:$0xff]
    %v169 = vld [vmem:[#allocation7 + $0x20] sm:$0xff]
    %v170 = vld [vmem:[#allocation7 + $0x28] sm:$0xff]
    %v171 = vld [vmem:[#allocation7 + $0x30] sm:$0xff]
    %v172 = vld [vmem:[#allocation7 + $0x38] sm:$0xff]
    %v173 = vld [vmem:[#allocation7 + $0x40] sm:$0xff]
    %v174 = vld [vmem:[#allocation7 + $0x48] sm:$0xff]
    %v175 = vld [vmem:[#allocation7 + $0x50] sm:$0xff]
    %v176 = vld [vmem:[#allocation7 + $0x58] sm:$0xff]
    %v177 = vld [vmem:[#allocation7 + $0x60] sm:$0xff]
    %v178 = vld [vmem:[#allocation7 + $0x68] sm:$0xff]
    %v179 = vld [vmem:[#allocation7 + $0x70] sm:$0xff]
    %v180 = vld [vmem:[#allocation7 + $0x78] sm:$0xff]
    %v181 = vld [vmem:[%s4] sm:$0x1]
    %v183 = vlaneseq
    %v184 = vshrl.u32 %v183, 7
    %v185 = vsub.s32 0, %v184
    %v186 = vrot.slane %v181, %v185
    %188 = vmatprep.subr.mxu0 0.0
    %189 = vmatpush1.msra.mxu0 %v180
    %190 = vmatprep.subr.mxu0 0.0
    %191 = vmatpush1.msra.mxu0 %v179
    %192 = vmatprep.subr.mxu0 0.0
    %193 = vmatpush1.msra.mxu0 %v178
    %194 = vmatprep.subr.mxu0 0.0
    %195 = vmatpush1.msra.mxu0 %v177
    %196 = vmatprep.subr.mxu0 0.0
    %197 = vmatpush1.msra.mxu0 %v176
    %198 = vmatprep.subr.mxu0 0.0
    %199 = vmatpush1.msra.mxu0 %v175
    %200 = vmatprep.subr.mxu0 0.0
    %201 = vmatpush1.msra.mxu0 %v174
    %202 = vmatprep.subr.mxu0 0.0
    %203 = vmatpush1.msra.mxu0 %v173
    %204 = vmatprep.subr.mxu0 0.0
    %205 = vmatpush1.msra.mxu0 %v172
    %206 = vmatprep.subr.mxu0 0.0
    %207 = vmatpush1.msra.mxu0 %v171
    %208 = vmatprep.subr.mxu0 0.0
    %209 = vmatpush1.msra.mxu0 %v170
    %210 = vmatprep.subr.mxu0 0.0
    %211 = vmatpush1.msra.mxu0 %v169
    %212 = vmatprep.subr.mxu0 0.0
    %213 = vmatpush1.msra.mxu0 %v168
    %214 = vmatprep.subr.mxu0 0.0
    %215 = vmatpush1.msra.mxu0 %v167
    %216 = vmatprep.subr.mxu0 0.0
    %217 = vmatpush1.msra.mxu0 %v166
    %218 = vmatprep.subr.mxu0 0.0
    %219 = vmatpush1.msra.mxu0 %v165
    %220 = vmatprep.subr.mxu0 0.0
    %221 = vmatpush2.msra.mxu0 0.0
    %222 = vmatprep.subr.mxu0 0.0
    %223 = vmatpush2.msra.mxu0 0.0
    %224 = vmatprep.subr.mxu0 0.0
    %225 = vmatpush2.msra.mxu0 0.0
    %226 = vmatprep.subr.mxu0 0.0
    %227 = vmatpush2.msra.mxu0 0.0
    %228 = vmatprep.subr.mxu0 0.0
    %229 = vmatpush2.msra.mxu0 0.0
    %230 = vmatprep.subr.mxu0 0.0
    %231 = vmatpush2.msra.mxu0 0.0
    %232 = vmatprep.subr.mxu0 0.0
    %233 = vmatpush2.msra.mxu0 0.0
    %234 = vmatprep.subr.mxu0 0.0
    %235 = vmatpush2.msra.mxu0 0.0
    %236 = vmatprep.subr.mxu0 0.0
    %237 = vmatpush2.msra.mxu0 0.0
    %238 = vmatprep.subr.mxu0 0.0
    %239 = vmatpush2.msra.mxu0 0.0
    %240 = vmatprep.subr.mxu0 0.0
    %241 = vmatpush2.msra.mxu0 0.0
    %242 = vmatprep.subr.mxu0 0.0
    %243 = vmatpush2.msra.mxu0 0.0
    %244 = vmatprep.subr.mxu0 0.0
    %245 = vmatpush2.msra.mxu0 0.0
    %246 = vmatprep.subr.mxu0 0.0
    %247 = vmatpush2.msra.mxu0 0.0
    %248 = vmatprep.subr.mxu0 0.0
    %249 = vmatpush2.msra.mxu0 0.0
    %250 = vmatprep.subr.mxu0 0.0
    %251 = vmatpush2.msra.mxu0 0.0
    %252 = vmatprep.mubr.f32.mxu0 0.0
    %253 = vmatmul.mubr.f32.gmra.mxu0 %v164
    %v254 = vpop.f32.mrf.mxu0
    %v255 = vadd.f32 %v186, %v254
    %v256 = vpop.f32.mrf.mxu0
    %257 = vdwg.mxu0
    %v258 = vmax.f32 %v255, 0.0
    %v259 = vld [vmem:[#allocation8] sm:$0xff]
    %v260 = vld [vmem:[#allocation8 + $0x8] sm:$0xff]
    %v261 = vld [vmem:[#allocation8 + $0x10] sm:$0xff]
    %v262 = vld [vmem:[#allocation8 + $0x18] sm:$0xff]
    %v263 = vld [vmem:[#allocation8 + $0x20] sm:$0xff]
    %v264 = vld [vmem:[#allocation8 + $0x28] sm:$0xff]
    %v265 = vld [vmem:[#allocation8 + $0x30] sm:$0xff]
    %v266 = vld [vmem:[#allocation8 + $0x38] sm:$0xff]
    %v267 = vld [vmem:[#allocation8 + $0x40] sm:$0xff]
    %v268 = vld [vmem:[#allocation8 + $0x48] sm:$0xff]
    %v269 = vld [vmem:[#allocation8 + $0x50] sm:$0xff]
    %v270 = vld [vmem:[#allocation8 + $0x58] sm:$0xff]
    %v271 = vld [vmem:[#allocation8 + $0x60] sm:$0xff]
    %v272 = vld [vmem:[#allocation8 + $0x68] sm:$0xff]
    %v273 = vld [vmem:[#allocation8 + $0x70] sm:$0xff]
    %v274 = vld [vmem:[#allocation8 + $0x78] sm:$0xff]
    %v275 = vld [vmem:[%s6] sm:$0x1]
    %v277 = vlaneseq
    %v278 = vshrl.u32 %v277, 7
    %v279 = vsub.s32 0, %v278
    %v280 = vrot.slane %v275, %v279
    %282 = vmatprep.subr.mxu0 0.0
    %283 = vmatpush1.msra.mxu0 %v274
    %284 = vmatprep.subr.mxu0 0.0
    %285 = vmatpush1.msra.mxu0 %v273
    %286 = vmatprep.subr.mxu0 0.0
    %287 = vmatpush1.msra.mxu0 %v272
    %288 = vmatprep.subr.mxu0 0.0
    %289 = vmatpush1.msra.mxu0 %v271
    %290 = vmatprep.subr.mxu0 0.0
    %291 = vmatpush1.msra.mxu0 %v270
    %292 = vmatprep.subr.mxu0 0.0
    %293 = vmatpush1.msra.mxu0 %v269
    %294 = vmatprep.subr.mxu0 0.0
    %295 = vmatpush1.msra.mxu0 %v268
    %296 = vmatprep.subr.mxu0 0.0
    %297 = vmatpush1.msra.mxu0 %v267
    %298 = vmatprep.subr.mxu0 0.0
    %299 = vmatpush1.msra.mxu0 %v266
    %300 = vmatprep.subr.mxu0 0.0
    %301 = vmatpush1.msra.mxu0 %v265
    %302 = vmatprep.subr.mxu0 0.0
    %303 = vmatpush1.msra.mxu0 %v264
    %304 = vmatprep.subr.mxu0 0.0
    %305 = vmatpush1.msra.mxu0 %v263
    %306 = vmatprep.subr.mxu0 0.0
    %307 = vmatpush1.msra.mxu0 %v262
    %308 = vmatprep.subr.mxu0 0.0
    %309 = vmatpush1.msra.mxu0 %v261
    %310 = vmatprep.subr.mxu0 0.0
    %311 = vmatpush1.msra.mxu0 %v260
    %312 = vmatprep.subr.mxu0 0.0
    %313 = vmatpush1.msra.mxu0 %v259
    %314 = vmatprep.subr.mxu0 0.0
    %315 = vmatpush2.msra.mxu0 0.0
    %316 = vmatprep.subr.mxu0 0.0
    %317 = vmatpush2.msra.mxu0 0.0
    %318 = vmatprep.subr.mxu0 0.0
    %319 = vmatpush2.msra.mxu0 0.0
    %320 = vmatprep.subr.mxu0 0.0
    %321 = vmatpush2.msra.mxu0 0.0
    %322 = vmatprep.subr.mxu0 0.0
    %323 = vmatpush2.msra.mxu0 0.0
    %324 = vmatprep.subr.mxu0 0.0
    %325 = vmatpush2.msra.mxu0 0.0
    %326 = vmatprep.subr.mxu0 0.0
    %327 = vmatpush2.msra.mxu0 0.0
    %328 = vmatprep.subr.mxu0 0.0
    %329 = vmatpush2.msra.mxu0 0.0
    %330 = vmatprep.subr.mxu0 0.0
    %331 = vmatpush2.msra.mxu0 0.0
    %332 = vmatprep.subr.mxu0 0.0
    %333 = vmatpush2.msra.mxu0 0.0
    %334 = vmatprep.subr.mxu0 0.0
    %335 = vmatpush2.msra.mxu0 0.0
    %336 = vmatprep.subr.mxu0 0.0
    %337 = vmatpush2.msra.mxu0 0.0
    %338 = vmatprep.subr.mxu0 0.0
    %339 = vmatpush2.msra.mxu0 0.0
    %340 = vmatprep.subr.mxu0 0.0
    %341 = vmatpush2.msra.mxu0 0.0
    %342 = vmatprep.subr.mxu0 0.0
    %343 = vmatpush2.msra.mxu0 0.0
    %344 = vmatprep.subr.mxu0 0.0
    %345 = vmatpush2.msra.mxu0 0.0
    %346 = vmatprep.mubr.f32.mxu0 0.0
    %347 = vmatmul.mubr.f32.gmra.mxu0 %v258
    %v348 = vpop.f32.mrf.mxu0
    %v349 = vadd.f32 %v280, %v348
    %v350 = vpop.f32.mrf.mxu0
    %351 = vdwg.mxu0
    %v352 = vtanh.pop %v349
    %353 = vst [vmem:[#allocation10] sm:$0xff] %v352
    // Predicated region
    $region46: #{actor_forward.1} parent=1 // pred_check
      _
    $region47: #{actor_forward.1} parent=1 // pred_check_branch
      %355 = sbr.rel (0) target = $region49
    $region48: #{actor_forward.1} parent=1 // pred_region
      %s357 = ssub.s32 128, 128
      %358 = vsyncadd [#allocation4], %s357
      %s360 = sshll.u32 [#allocation10], 4
      %s361 = int_to_ptr.vmem [resolvable:$true] %s360
      %363 = dma.vmem_to_hbm [thread:$0]  %s361, 128, %s7, [#allocation4]
    $region49: #{actor_forward.1} parent=1 // pred_fallthru
      _
    // Predicated region
    $region50: #{actor_forward.1} parent=1 // pred_check
      _
    $region51: #{actor_forward.1} parent=1 // pred_check_branch
      %365 = sbr.rel (0) target = $region53
    $region52: #{actor_forward.1} parent=1 // pred_region
      %366 = dma.done [#allocation4], 128
    $region53: #{actor_forward.1} parent=1 // pred_fallthru
      _
    %367 = vsyncpa [#allocation3], 1
    %368 = vsyncpa [#allocation6], 1
    %369 = vsyncpa [#allocation9], 1
    %370 = vsyncpa [#allocation4], 1

</llo_original>
